<compile_context>
chip_gen: v7x
topology: tpu7x:2x2x1
jax: 0.10.0
libtpu: 0.0.40
codegen_flags: <defaults>
</compile_context>

<pallas_src>
import functools

import jax
import jax.numpy as jnp
from jax import lax
from jax.experimental import pallas as pl
from jax.experimental.pallas import tpu as pltpu


def _round_up(n, k):
    return ((n + k - 1) // k) * k


def _vmem_limit_bytes():
    cap = 128 * 1024 * 1024
    try:
        info = pltpu.get_tpu_info()
        c = getattr(info, "vmem_capacity_bytes", None)
        if c:
            cap = int(c)
    except Exception:
        pass
    return int(min(cap * 3 // 4, 100 * 1024 * 1024))


def _fit_tiles(tm, th, d, budget):
    """Shrink (tm, th) until the double-buffered pipeline fits the budget."""
    def est(tm_, th_):
        # x bf16, w1+w3 (D,th) bf16, w2 (th,D) bf16, out f32, routing col f32
        return 2 * (tm_ * d * 2 + 3 * d * th_ * 2 + tm_ * d * 4 + tm_ * 4)
    if est(tm, th) > budget and th > 128:
        th = 128
    while est(tm, th) > budget and tm > 64:
        tm //= 2
    return tm, th


# ---------------------------------------------------------------------------
# Stage 1: gating (scores -> top-2 -> softmax -> dense routing matrix, f32)
# ---------------------------------------------------------------------------
def _gate_kernel(x_ref, gate_ref, routing_ref, *, num_experts):
    x = x_ref[...]                                          # (TG, D) f32
    scores = jnp.dot(x, gate_ref[...],
                     preferred_element_type=jnp.float32)    # (TG, Ep)
    ep = scores.shape[1]
    eidx = lax.broadcasted_iota(jnp.int32, scores.shape, 1)
    scores = jnp.where(eidx < num_experts, scores, -jnp.inf)  # mask pad lanes
    # top-1 (first occurrence, like torch.topk)
    m1 = jnp.max(scores, axis=-1, keepdims=True)
    i1 = jnp.min(jnp.where(scores == m1, eidx, ep), axis=-1, keepdims=True)
    mask1 = eidx == i1
    # top-2: mask out the first winner, take max of the rest
    masked = jnp.where(mask1, -jnp.inf, scores)
    m2 = jnp.max(masked, axis=-1, keepdims=True)
    i2 = jnp.min(jnp.where(masked == m2, eidx, ep), axis=-1, keepdims=True)
    mask2 = eidx == i2
    # softmax over the two selected logits (m1 >= m2)
    p2 = jnp.exp(m2 - m1)
    denom = 1.0 + p2
    routing_ref[...] = (jnp.where(mask1, 1.0 / denom, 0.0)
                        + jnp.where(mask2, p2 / denom, 0.0))


# ---------------------------------------------------------------------------
# Stage 2: grouped per-expert SwiGLU FFN (tile -> expert via scalar prefetch)
# ---------------------------------------------------------------------------
def _moe_ffn_kernel(tile_expert_ref, w_ref, x_ref, w1_ref, w3_ref, w2_ref,
                    out_ref):
    del tile_expert_ref  # consumed by the index_maps
    h = pl.program_id(1)

    x = x_ref[...]                                          # (TM, D)  bf16
    w1 = w1_ref[0]                                          # (D, TH)  bf16
    w3 = w3_ref[0]                                          # (D, TH)  bf16
    w2 = w2_ref[0]                                          # (TH, D)  bf16
    r = w_ref[...]                                          # (TM, 1)  f32

    h1 = jnp.dot(x, w1, preferred_element_type=jnp.float32)     # (TM, TH)
    h1 = h1 * jax.nn.sigmoid(h1)                                 # SiLU
    h3 = jnp.dot(x, w3, preferred_element_type=jnp.float32)
    hp = (h1 * h3 * r).astype(jnp.bfloat16)   # fold routing weight here
    contrib = jnp.dot(hp, w2, preferred_element_type=jnp.float32)  # (TM, D)

    # Accumulate directly into the resident f32 output block (no scratch).
    @pl.when(h == 0)
    def _init():
        out_ref[...] = contrib

    @pl.when(h != 0)
    def _acc():
        out_ref[...] += contrib


# ---------------------------------------------------------------------------
# Wrapper
# ---------------------------------------------------------------------------
def moe_feed_forward(x, gate_w, w1, w2, w3, *, tm=512, th=256, tg=256):
    """Pallas equivalent of MOEFeedForward.forward. Returns (T, dim)."""
    E, H, D = w1.shape
    x2d = x.reshape(-1, D)
    T = x2d.shape[0]
    x_f32 = x2d.astype(jnp.float32)

    vmem_limit = _vmem_limit_bytes()

    # ---- tile selection ----------------------------------------------------
    # Cap tm near T so there are >=2 assignment tiles (keeps both v7x TCs busy
    # on the 'parallel' axis); keep it a multiple of 16 for bf16 packing.
    tm = max(16, min(tm, _round_up(T, 16)))
    th = min(th, _round_up(H, 128))
    tm, th = _fit_tiles(tm, th, D, budget=(vmem_limit * 7) // 10)
    Hp = _round_up(H, th)
    nh = Hp // th

    # ---- Stage 1: gating in f32 (exact expert selection) --------------------
    tg = max(8, min(tg, _round_up(T, 8)))
    T_pad = _round_up(T, tg)
    xg = x_f32 if T_pad == T else jnp.pad(x_f32, ((0, T_pad - T), (0, 0)))
    E_pad = _round_up(E, 128)
    gate_wt = jnp.zeros((D, E_pad), jnp.float32).at[:, :E].set(
        gate_w.astype(jnp.float32).T)

    routing = pl.pallas_call(
        functools.partial(_gate_kernel, num_experts=E),
        out_shape=jax.ShapeDtypeStruct((T_pad, E_pad), jnp.float32),
        grid_spec=pltpu.PrefetchScalarGridSpec(
            num_scalar_prefetch=0,
            grid=(T_pad // tg,),
            in_specs=[
                pl.BlockSpec((tg, D), lambda t: (t, 0)),
                pl.BlockSpec((D, E_pad), lambda t: (0, 0)),
            ],
            out_specs=pl.BlockSpec((tg, E_pad), lambda t: (t, 0)),
        ),
        compiler_params=pltpu.CompilerParams(
            dimension_semantics=("parallel",)),
    )(xg, gate_wt)
    routing = routing[:T, :E]                              # (T, E)

    # top-2 of the routing matrix: values are exactly the softmaxed weights of
    # the selected experts (a zero-weight pick contributes nothing).
    wts2, idx2 = lax.top_k(routing, 2)                     # (T, 2)

    # ---- group assignments by expert (XLA-side layout plumbing) -------------
    A = 2 * T
    token_flat = jnp.repeat(jnp.arange(T, dtype=jnp.int32), 2)
    expert_flat = idx2.reshape(-1).astype(jnp.int32)
    weight_flat = wts2.reshape(-1).astype(jnp.float32)

    order = jnp.argsort(expert_flat, stable=True)
    s_expert = expert_flat[order]
    s_token = token_flat[order]
    s_weight = weight_flat[order]

    counts = jnp.bincount(s_expert, length=E).astype(jnp.int32)
    starts = jnp.concatenate(
        [jnp.zeros((1,), jnp.int32), jnp.cumsum(counts)[:-1]]).astype(jnp.int32)
    padded_counts = ((counts + tm - 1) // tm) * tm          # per-expert pad
    padded_starts = jnp.concatenate(
        [jnp.zeros((1,), jnp.int32),
         jnp.cumsum(padded_counts)[:-1]]).astype(jnp.int32)

    n_tiles = (A + tm - 1) // tm + E                        # static upper bound
    cap = n_tiles * tm

    dest = padded_starts[s_expert] + (jnp.arange(A, dtype=jnp.int32)
                                      - starts[s_expert])
    gather_tok = jnp.full((cap,), T, jnp.int32).at[dest].set(s_token)
    gather_wgt = jnp.zeros((cap,), jnp.float32).at[dest].set(s_weight)

    tile_ends = (padded_starts + padded_counts) // tm        # (E,) tile units
    tile_ids = jnp.arange(n_tiles, dtype=jnp.int32)
    tile_expert = jnp.minimum(
        jnp.sum((tile_ids[:, None] >= tile_ends[None, :]).astype(jnp.int32),
                axis=1),
        E - 1).astype(jnp.int32)                             # (n_tiles,)

    x_bf = jnp.concatenate(
        [x2d.astype(jnp.bfloat16), jnp.zeros((1, D), jnp.bfloat16)], axis=0)
    x_grouped = x_bf[gather_tok]                             # (cap, D) bf16
    w_grouped = gather_wgt[:, None]                          # (cap, 1) f32

    # ---- Stage 2: grouped per-expert SwiGLU FFN ------------------------------
    w1t = jnp.zeros((E, D, Hp), jnp.bfloat16).at[:, :, :H].set(
        jnp.transpose(w1, (0, 2, 1)).astype(jnp.bfloat16))
    w3t = jnp.zeros((E, D, Hp), jnp.bfloat16).at[:, :, :H].set(
        jnp.transpose(w3, (0, 2, 1)).astype(jnp.bfloat16))
    w2p = jnp.zeros((E, Hp, D), jnp.bfloat16).at[:, :H, :].set(
        w2.astype(jnp.bfloat16))

    out_grouped = pl.pallas_call(
        _moe_ffn_kernel,
        out_shape=jax.ShapeDtypeStruct((cap, D), jnp.float32),
        grid_spec=pltpu.PrefetchScalarGridSpec(
            num_scalar_prefetch=1,                            # tile_expert
            grid=(n_tiles, nh),
            in_specs=[
                pl.BlockSpec((tm, 1), lambda i, h, te: (i, 0)),     # routing w
                pl.BlockSpec((tm, D), lambda i, h, te: (i, 0)),     # x tile
                pl.BlockSpec((1, D, th), lambda i, h, te: (te[i], 0, h)),  # w1^T
                pl.BlockSpec((1, D, th), lambda i, h, te: (te[i], 0, h)),  # w3^T
                pl.BlockSpec((1, th, D), lambda i, h, te: (te[i], h, 0)),  # w2
            ],
            out_specs=pl.BlockSpec((tm, D), lambda i, h, te: (i, 0)),
        ),
        compiler_params=pltpu.CompilerParams(
            dimension_semantics=("parallel", "arbitrary"),
            vmem_limit_bytes=vmem_limit),
    )(tile_expert, w_grouped, x_grouped, w1t, w3t, w2p)

    # Scatter-add assignment outputs back to tokens (padding rows go to the
    # dummy segment T and are dropped; weights were already folded in-kernel).
    out = jnp.zeros((T + 1, D), jnp.float32).at[gather_tok].add(out_grouped)
    return out[:T].astype(x.dtype)


# ---------------------------------------------------------------------------
# Pure-JAX reference mirroring the torch code exactly (f32)
# ---------------------------------------------------------------------------
def moe_ref(x, gate_w, w1, w2, w3):
    D = gate_w.shape[1]
    xt = x.reshape(-1, D)
    scores = xt @ gate_w.T
    vals, idx = lax.top_k(scores, 2)
    ew = jax.nn.softmax(vals, axis=-1)
    w1g = w1[idx]  # (T, 2, H, D)
    w3g = w3[idx]
    w2g = w2[idx]
    x1 = jax.nn.silu(jnp.einsum('ti,taoi->tao', xt, w1g))
    x3 = jnp.einsum('ti,taoi->tao', xt, w3g)
    eo = jnp.einsum('tao,taoi->tai', x1 * x3, w2g)
    return jnp.einsum('tai,ta->ti', eo, ew)


if __name__ == "__main__":
    batch, seq = 2, 8
    dim, hidden, num_experts = 64, 256, 8

    key = jax.random.PRNGKey(0)
    k_x, k_g, k1, k2, k3 = jax.random.split(key, 5)
    x = jax.random.normal(k_x, (batch, seq, dim), jnp.float32)
    # nn.Linear-style gate init (deterministic), randn-style expert weights.
    gate_w = jax.random.normal(k_g, (num_experts, dim), jnp.float32) / jnp.sqrt(dim)
    w1 = jax.random.normal(k1, (num_experts, hidden, dim), jnp.float32)
    w2 = jax.random.normal(k2, (num_experts, hidden, dim), jnp.float32)
    w3 = jax.random.normal(k3, (num_experts, hidden, dim), jnp.float32)

    # tm=16 -> several grouped assignment tiles; th=128 with hidden=256 -> two
    # hidden tiles (exercises the in-place output accumulation across h).
    out = jax.block_until_ready(
        moe_feed_forward(x, gate_w, w1, w2, w3, tm=16, th=128))
    ref = moe_ref(x, gate_w, w1, w2, w3)

    assert out.shape == (batch * seq, dim), out.shape
    scale = jnp.maximum(jnp.max(jnp.abs(ref)), 1.0)
    max_err = float(jnp.max(jnp.abs(out - ref)))
    # bf16 weights/activations with f32 accumulation -> relaxed tolerance.
    assert max_err <= 6e-2 * float(scale), (max_err, float(scale))
    print("KERNEL_OK")
</pallas_src>

<mosaic_0001>
module attributes {stable_mosaic.version = 11 : i64} {
  func.func @_gate_kernel(%arg0: i32, %arg1: memref<16x64xf32, #tpu.memory_space<vmem>>, %arg2: memref<64x128xf32, #tpu.memory_space<vmem>>, %arg3: memref<16x128xf32, #tpu.memory_space<vmem>>) attributes {dimension_semantics = [#tpu.dimension_semantics<parallel>], iteration_bounds = array<i64: 1>, scalar_prefetch = 0 : i64, scratch_operands = 0 : i64, tpu.core_type = #tpu.core_type<tc>, window_params = [{transform_indices = @transform_0, window_bounds = array<i64: 16, 64>}, {pipeline_mode = #tpu.pipeline_mode<synchronous>, transform_indices = @transform_1, window_bounds = array<i64: 64, 128>}, {transform_indices = @transform_2, window_bounds = array<i64: 16, 128>}]} {
    %c0 = arith.constant 0 : index
    %c0_0 = arith.constant 0 : index
    %0 = vector.load %arg1[%c0, %c0_0] : memref<16x64xf32, #tpu.memory_space<vmem>>, vector<16x64xf32>
    %c0_1 = arith.constant 0 : index
    %c0_2 = arith.constant 0 : index
    %1 = vector.load %arg2[%c0_1, %c0_2] : memref<64x128xf32, #tpu.memory_space<vmem>>, vector<64x128xf32>
    %cst = arith.constant dense<0.000000e+00> : vector<16x128xf32>
    %2 = tpu.matmul %0, %1, %cst {dimension_numbers = #tpu.dot_dimension_numbers<[1], [0], [0], [1], [0, 0, 1, 1], [], []>} : vector<16x64xf32>, vector<64x128xf32>, vector<16x128xf32> -> vector<16x128xf32>
    %3 = tpu.iota {dimensions = array<i32: 1>} : vector<16x128xi32>
    %c8_i32 = arith.constant 8 : i32
    %4 = vector.broadcast %c8_i32 : i32 to vector<16x128xi32>
    %5 = arith.cmpi slt, %3, %4 : vector<16x128xi32>
    %cst_3 = arith.constant 0xFF800000 : f32
    %6 = vector.broadcast %cst_3 : f32 to vector<16x128xf32>
    %7 = arith.select %5, %2, %6 : vector<16x128xi1>, vector<16x128xf32>
    %cst_4 = arith.constant dense<0xFF800000> : vector<16xf32>
    %8 = vector.multi_reduction <maximumf>, %7, %cst_4 [1] : vector<16x128xf32> to vector<16xf32>
    %9 = vector.shape_cast %8 : vector<16xf32> to vector<16x1xf32>
    %10 = vector.broadcast %9 : vector<16x1xf32> to vector<16x128xf32>
    %11 = arith.cmpf oeq, %7, %10 : vector<16x128xf32>
    %c128_i32 = arith.constant 128 : i32
    %12 = vector.broadcast %c128_i32 : i32 to vector<16x128xi32>
    %13 = arith.select %11, %3, %12 : vector<16x128xi1>, vector<16x128xi32>
    %cst_5 = arith.constant dense<2147483647> : vector<16xi32>
    %14 = vector.multi_reduction <minsi>, %13, %cst_5 [1] : vector<16x128xi32> to vector<16xi32>
    %15 = vector.shape_cast %14 : vector<16xi32> to vector<16x1xi32>
    %16 = vector.broadcast %15 : vector<16x1xi32> to vector<16x128xi32>
    %17 = arith.cmpi eq, %3, %16 : vector<16x128xi32>
    %cst_6 = arith.constant 0xFF800000 : f32
    %18 = vector.broadcast %cst_6 : f32 to vector<16x128xf32>
    %19 = arith.select %17, %18, %7 : vector<16x128xi1>, vector<16x128xf32>
    %cst_7 = arith.constant dense<0xFF800000> : vector<16xf32>
    %20 = vector.multi_reduction <maximumf>, %19, %cst_7 [1] : vector<16x128xf32> to vector<16xf32>
    %21 = vector.shape_cast %20 : vector<16xf32> to vector<16x1xf32>
    %22 = vector.broadcast %21 : vector<16x1xf32> to vector<16x128xf32>
    %23 = arith.cmpf oeq, %19, %22 : vector<16x128xf32>
    %c128_i32_8 = arith.constant 128 : i32
    %24 = vector.broadcast %c128_i32_8 : i32 to vector<16x128xi32>
    %25 = arith.select %23, %3, %24 : vector<16x128xi1>, vector<16x128xi32>
    %cst_9 = arith.constant dense<2147483647> : vector<16xi32>
    %26 = vector.multi_reduction <minsi>, %25, %cst_9 [1] : vector<16x128xi32> to vector<16xi32>
    %27 = vector.shape_cast %26 : vector<16xi32> to vector<16x1xi32>
    %28 = vector.broadcast %27 : vector<16x1xi32> to vector<16x128xi32>
    %29 = arith.cmpi eq, %3, %28 : vector<16x128xi32>
    %30 = arith.subf %21, %9 : vector<16x1xf32>
    %31 = math.exp %30 : vector<16x1xf32>
    %cst_10 = arith.constant 1.000000e+00 : f32
    %32 = vector.broadcast %cst_10 : f32 to vector<16x1xf32>
    %33 = arith.addf %32, %31 : vector<16x1xf32>
    %cst_11 = arith.constant 1.000000e+00 : f32
    %34 = vector.broadcast %cst_11 : f32 to vector<16x1xf32>
    %35 = arith.divf %34, %33 : vector<16x1xf32>
    %cst_12 = arith.constant 0.000000e+00 : f32
    %36 = vector.shape_cast %35 : vector<16x1xf32> to vector<16x1xf32>
    %37 = vector.broadcast %36 : vector<16x1xf32> to vector<16x128xf32>
    %38 = vector.broadcast %cst_12 : f32 to vector<16x128xf32>
    %39 = arith.select %17, %37, %38 : vector<16x128xi1>, vector<16x128xf32>
    %40 = arith.divf %31, %33 : vector<16x1xf32>
    %cst_13 = arith.constant 0.000000e+00 : f32
    %41 = vector.shape_cast %40 : vector<16x1xf32> to vector<16x1xf32>
    %42 = vector.broadcast %41 : vector<16x1xf32> to vector<16x128xf32>
    %43 = vector.broadcast %cst_13 : f32 to vector<16x128xf32>
    %44 = arith.select %29, %42, %43 : vector<16x128xi1>, vector<16x128xf32>
    %45 = arith.addf %39, %44 : vector<16x128xf32>
    %c0_14 = arith.constant 0 : index
    %c0_15 = arith.constant 0 : index
    %46 = vector.load %arg3[%c0_14, %c0_15] : memref<16x128xf32, #tpu.memory_space<vmem>>, vector<16x128xf32>
    tpu.vector_store %arg3[%c0_14, %c0_15], %45 {strides = array<i32>} : memref<16x128xf32, #tpu.memory_space<vmem>>, vector<16x128xf32>,
    return
  }
  func.func @transform_0(%arg0: i32) -> (i32, i32) {
    %c0_i32 = arith.constant 0 : i32
    %c0_i32_0 = arith.constant 0 : i32
    return %arg0, %c0_i32 : i32, i32
  }
  func.func @transform_1(%arg0: i32) -> (i32, i32) {
    %c0_i32 = arith.constant 0 : i32
    %c0_i32_0 = arith.constant 0 : i32
    %c0_i32_1 = arith.constant 0 : i32
    return %c0_i32, %c0_i32_0 : i32, i32
  }
  func.func @transform_2(%arg0: i32) -> (i32, i32) {
    %c0_i32 = arith.constant 0 : i32
    %c0_i32_0 = arith.constant 0 : i32
    return %arg0, %c0_i32 : i32, i32
  }
}

</mosaic_0001>

<llo_original>
// kernel: tpu_custom_call.1
$region0: #{tpu_custom_call.1}
  #allocation0 [shape = 'u32[]', space=smem, size = 0x4, offset = 0x4, fixed_abs, tag = 'smem constant byte address 0x4 - core index']
  #allocation1 [shape = 'u32[144,128]{1,0:T(1,128)}', space=vmem, size = 0x12000, scoped, tag = 'internal scratch']
  %s0 = inlined_call_operand.hbm [shape: f32[16,64], index: 0, kind: input, shape index: {}]
  %s1 = inlined_call_operand.hbm [shape: f32[64,128], index: 1, kind: input, shape index: {}]
  %s2 = inlined_call_operand.hbm [shape: f32[16,128], index: 2, kind: output, shape index: {}]
  %s3 = sld [smem:[#allocation0]]
  $region26: #{tpu_custom_call.1} parent=0
    _
  %s5 = ssub.s32 1, %s3
  %s6 = scalar_select 0, %s5, %s3
  $region1: #{tpu_custom_call.1} parent=0
    #allocation2 [shape = 'u8[8192]{0}', space=vmem, size = 0x2000, scoped, tag = 'input window, operand 0, single buffered']
    #allocation3 [shape = 's32[1]{0}', space=sflag, size = 0x4, scoped, tag = 'scoped memory for tpu_custom_call.1']
    #allocation4 [shape = 's32[1]{0}', space=sflag, size = 0x4, scoped, tag = 'scoped memory for tpu_custom_call.1']
    #allocation5 [shape = 'u8[32768]{0}', space=vmem, size = 0x8000, scoped, tag = 'input window, operand 1, single buffered']
    #allocation6 [shape = 's32[1]{0}', space=sflag, size = 0x4, scoped, tag = 'scoped memory for tpu_custom_call.1']
    #allocation7 [shape = 'u8[8192]{0}', space=vmem, size = 0x2000, scoped, tag = 'output window, operand 0, single buffered']
    %7 = vsyncpa [#allocation3], 0
    %8 = vsyncpa [#allocation6], 0
    %9 = vsyncpa [#allocation4], 0
    // Predicated region
    $region2: #{tpu_custom_call.1} parent=1 // pred_check
      _
    $region3: #{tpu_custom_call.1} parent=1 // pred_check_branch
      %11 = sbr.rel (0) target = $region5
    $region4: #{tpu_custom_call.1} parent=1 // pred_region
      %s13 = ssub.s32 256, 256
      %14 = vsyncadd [#allocation3], %s13
      %s15 = sshll.u32 [#allocation2], 4
      %s16 = int_to_ptr.vmem [resolvable:$true] %s15
      %21 = dma.hbm_to_vmem [thread:$0]  %s0, 256, %s16, [#allocation3], 128, 128, 8
    $region5: #{tpu_custom_call.1} parent=1 // pred_fallthru
      _
    // Predicated region
    $region6: #{tpu_custom_call.1} parent=1 // pred_check
      _
    $region7: #{tpu_custom_call.1} parent=1 // pred_check_branch
      %23 = sbr.rel (0) target = $region9
    $region8: #{tpu_custom_call.1} parent=1 // pred_region
      %s25 = ssub.s32 1024, 1024
      %26 = vsyncadd [#allocation6], %s25
      %s27 = sshll.u32 [#allocation5], 4
      %s28 = int_to_ptr.vmem [resolvable:$true] %s27
      %33 = dma.hbm_to_vmem [thread:$0]  %s1, 1024, %s28, [#allocation6], 128, 128, 8
    $region9: #{tpu_custom_call.1} parent=1 // pred_fallthru
      _
    // Predicated region
    $region10: #{tpu_custom_call.1} parent=1 // pred_check
      _
    $region11: #{tpu_custom_call.1} parent=1 // pred_check_branch
      %35 = sbr.rel (0) target = $region13
    $region12: #{tpu_custom_call.1} parent=1 // pred_region
      %36 = dma.done [#allocation3], 256
    $region13: #{tpu_custom_call.1} parent=1 // pred_fallthru
      _
    // Predicated region
    $region14: #{tpu_custom_call.1} parent=1 // pred_check
      _
    $region15: #{tpu_custom_call.1} parent=1 // pred_check_branch
      %38 = sbr.rel (0) target = $region17
    $region16: #{tpu_custom_call.1} parent=1 // pred_region
      %39 = dma.done [#allocation6], 1024
    $region17: #{tpu_custom_call.1} parent=1 // pred_fallthru
      _
    %v40 = vld [vmem:[#allocation2] sm:$0xff]
    %v41 = vld [vmem:[#allocation2 + $0x8] sm:$0xff]
    %v42 = vld [vmem:[#allocation5] sm:$0xff]
    %v43 = vld [vmem:[#allocation5 + $0x8] sm:$0xff]
    %v44 = vld [vmem:[#allocation5 + $0x10] sm:$0xff]
    %v45 = vld [vmem:[#allocation5 + $0x18] sm:$0xff]
    %v46 = vld [vmem:[#allocation5 + $0x20] sm:$0xff]
    %v47 = vld [vmem:[#allocation5 + $0x28] sm:$0xff]
    %v48 = vld [vmem:[#allocation5 + $0x30] sm:$0xff]
    %v49 = vld [vmem:[#allocation5 + $0x38] sm:$0xff]
    %vm50 = vcmask 523264
    %v52 = vsel %vm50, %v40, 0
    %v55 = vsel %vm50, %v41, 0
    %57 = vmatprep.subr.mxu0 0.0
    %58 = vmatpush1.msra.mxu0 %v42
    %59 = vmatprep.subr.mxu0 0.0
    %60 = vmatpush1.msra.mxu0 %v43
    %61 = vmatprep.subr.mxu0 0.0
    %62 = vmatpush1.msra.mxu0 %v44
    %63 = vmatprep.subr.mxu0 0.0
    %64 = vmatpush1.msra.mxu0 %v45
    %65 = vmatprep.subr.mxu0 0.0
    %66 = vmatpush1.msra.mxu0 %v46
    %67 = vmatprep.subr.mxu0 0.0
    %68 = vmatpush1.msra.mxu0 %v47
    %69 = vmatprep.subr.mxu0 0.0
    %70 = vmatpush1.msra.mxu0 %v48
    %71 = vmatprep.subr.mxu0 0.0
    %72 = vmatpush1.msra.mxu0 %v49
    %73 = vmatprep.subr.mxu0 0.0
    %74 = vmatpush1.msra.mxu0 0.0
    %75 = vmatprep.subr.mxu0 0.0
    %76 = vmatpush1.msra.mxu0 0.0
    %77 = vmatprep.subr.mxu0 0.0
    %78 = vmatpush1.msra.mxu0 0.0
    %79 = vmatprep.subr.mxu0 0.0
    %80 = vmatpush1.msra.mxu0 0.0
    %81 = vmatprep.subr.mxu0 0.0
    %82 = vmatpush1.msra.mxu0 0.0
    %83 = vmatprep.subr.mxu0 0.0
    %84 = vmatpush1.msra.mxu0 0.0
    %85 = vmatprep.subr.mxu0 0.0
    %86 = vmatpush1.msra.mxu0 0.0
    %87 = vmatprep.subr.mxu0 0.0
    %88 = vmatpush1.msra.mxu0 0.0
    %89 = vmatprep.subr.mxu0 0.0
    %90 = vmatpush1.msra.mxu0 0.0
    %91 = vmatprep.subr.mxu0 0.0
    %92 = vmatpush1.msra.mxu0 0.0
    %93 = vmatprep.subr.mxu0 0.0
    %94 = vmatpush1.msra.mxu0 0.0
    %95 = vmatprep.subr.mxu0 0.0
    %96 = vmatpush1.msra.mxu0 0.0
    %97 = vmatprep.subr.mxu0 0.0
    %98 = vmatpush1.msra.mxu0 0.0
    %99 = vmatprep.subr.mxu0 0.0
    %100 = vmatpush1.msra.mxu0 0.0
    %101 = vmatprep.subr.mxu0 0.0
    %102 = vmatpush1.msra.mxu0 0.0
    %103 = vmatprep.subr.mxu0 0.0
    %104 = vmatpush1.msra.mxu0 0.0
    %105 = vmatprep.subr.mxu0 0.0
    %106 = vmatpush1.msra.mxu0 0.0
    %107 = vmatprep.subr.mxu0 0.0
    %108 = vmatpush1.msra.mxu0 0.0
    %109 = vmatprep.subr.mxu0 0.0
    %110 = vmatpush1.msra.mxu0 0.0
    %111 = vmatprep.subr.mxu0 0.0
    %112 = vmatpush1.msra.mxu0 0.0
    %113 = vmatprep.subr.mxu0 0.0
    %114 = vmatpush1.msra.mxu0 0.0
    %115 = vmatprep.subr.mxu0 0.0
    %116 = vmatpush1.msra.mxu0 0.0
    %117 = vmatprep.subr.mxu0 0.0
    %118 = vmatpush1.msra.mxu0 0.0
    %119 = vmatprep.subr.mxu0 0.0
    %120 = vmatpush1.msra.mxu0 0.0
    %121 = vmatprep.mubr.f32.mxu0 0.0
    %122 = vmatmul.mubr.f32.gmra.mrb[0].mxu0 %v52
    %v123 = vpop.f32.mrb[0].mxu0
    %v124 = vadd.f32 0.0, %v123
    %v125 = vpop.f32.mrb[0].mxu0
    %126 = vmatprep.mubr.f32.mxu0 0.0
    %127 = vmatmul.mubr.f32.gmra.mrb[0].mxu0 %v55
    %v128 = vpop.f32.mrb[0].mxu0
    %v129 = vadd.f32 0.0, %v128
    %v130 = vpop.f32.mrb[0].mxu0
    %131 = vdwg.mxu0
    %v132 = vlaneseq
    %v133 = vand.u32 %v132, 127
    %vm134 = vcmp.lt.s32.totalorder %v133, 8
    %v135 = vsel %vm134, %v124, -inf
    %v136 = vsel %vm134, %v129, -inf
    %137 = vmax.xlane.f32.xlu0 %v135
    %v138 = vpop.xlane.xlu0 %137
    %139 = vmax.xlane.f32.xlu0 %v136
    %v140 = vpop.xlane.xlu0 %139
    %vm141 = vcmp.eq.f32.partialorder %v135, %v138
    %vm142 = vcmp.eq.f32.partialorder %v136, %v140
    %v143 = vsel %vm141, %v133, 128
    %v144 = vsel %vm142, %v133, 128
    %v145 = vand.u32 %v143, 65535
    %v146 = vshra.s32 %v143, 16
    %v147 = vcvt.s32.f32 %v145
    %v148 = vcvt.s32.f32 %v146
    %149 = vmin.xlane.f32.xlu0 %v148
    %v150 = vpop.xlane.xlu0 %149
    %vm151 = vcmp.eq.f32.partialorder %v148, %v150
    %v152 = vsel %vm151, %v147, inf
    %153 = vmin.xlane.f32.xlu0 %v152
    %v154 = vpop.xlane.xlu0 %153
    %v155 = vcvt.f32.s32 %v154
    %v156 = vcvt.f32.s32 %v150
    %v157 = vshll.u32 %v156, 16
    %v158 = vadd.s32 %v157, %v155
    %v159 = vand.u32 %v144, 65535
    %v160 = vshra.s32 %v144, 16
    %v161 = vcvt.s32.f32 %v159
    %v162 = vcvt.s32.f32 %v160
    %163 = vmin.xlane.f32.xlu0 %v162
    %v164 = vpop.xlane.xlu0 %163
    %vm165 = vcmp.eq.f32.partialorder %v162, %v164
    %v166 = vsel %vm165, %v161, inf
    %167 = vmin.xlane.f32.xlu0 %v166
    %v168 = vpop.xlane.xlu0 %167
    %v169 = vcvt.f32.s32 %v168
    %v170 = vcvt.f32.s32 %v164
    %v171 = vshll.u32 %v170, 16
    %v172 = vadd.s32 %v171, %v169
    %vm173 = vcmp.eq.s32.totalorder %v133, %v158
    %vm174 = vcmp.eq.s32.totalorder %v133, %v172
    %v175 = vsel %vm173, -inf, %v135
    %v176 = vsel %vm174, -inf, %v136
    %177 = vmax.xlane.f32.xlu0 %v175
    %v178 = vpop.xlane.xlu0 %177
    %179 = vmax.xlane.f32.xlu0 %v176
    %v180 = vpop.xlane.xlu0 %179
    %vm181 = vcmp.eq.f32.partialorder %v175, %v178
    %vm182 = vcmp.eq.f32.partialorder %v176, %v180
    %v183 = vsel %vm181, %v133, 128
    %v184 = vsel %vm182, %v133, 128
    %v185 = vand.u32 %v183, 65535
    %v186 = vshra.s32 %v183, 16
    %v187 = vcvt.s32.f32 %v185
    %v188 = vcvt.s32.f32 %v186
    %189 = vmin.xlane.f32.xlu0 %v188
    %v190 = vpop.xlane.xlu0 %189
    %vm191 = vcmp.eq.f32.partialorder %v188, %v190
    %v192 = vsel %vm191, %v187, inf
    %193 = vmin.xlane.f32.xlu0 %v192
    %v194 = vpop.xlane.xlu0 %193
    %v195 = vcvt.f32.s32 %v194
    %v196 = vcvt.f32.s32 %v190
    %v197 = vshll.u32 %v196, 16
    %v198 = vadd.s32 %v197, %v195
    %v199 = vand.u32 %v184, 65535
    %v200 = vshra.s32 %v184, 16
    %v201 = vcvt.s32.f32 %v199
    %v202 = vcvt.s32.f32 %v200
    %203 = vmin.xlane.f32.xlu0 %v202
    %v204 = vpop.xlane.xlu0 %203
    %vm205 = vcmp.eq.f32.partialorder %v202, %v204
    %v206 = vsel %vm205, %v201, inf
    %207 = vmin.xlane.f32.xlu0 %v206
    %v208 = vpop.xlane.xlu0 %207
    %v209 = vcvt.f32.s32 %v208
    %v210 = vcvt.f32.s32 %v204
    %v211 = vshll.u32 %v210, 16
    %v212 = vadd.s32 %v211, %v209
    %vm213 = vcmp.eq.s32.totalorder %v133, %v198
    %vm214 = vcmp.eq.s32.totalorder %v133, %v212
    %v215 = vsub.f32 %v178, %v138
    %v216 = vsub.f32 %v180, %v140
    %v217 = vmul.f32 %v215, 1.442695
    %v218 = vpow.pop %v217
    %v219 = vmul.f32 %v216, 1.442695
    %v220 = vpow.pop %v219
    %v221 = vadd.f32 %v218, 1.0
    %v222 = vadd.f32 %v220, 1.0
    %v223 = vrcp.pop %v221
    %v224 = vmul.f32 1.0, %v223
    %v225 = vrcp.pop %v222
    %v226 = vmul.f32 1.0, %v225
    %v227 = vsel %vm173, %v224, 0.0
    %v228 = vsel %vm174, %v226, 0.0
    %v229 = vmul.f32 %v218, %v223
    %v230 = vmul.f32 %v220, %v225
    %v231 = vsel %vm213, %v229, 0.0
    %v232 = vsel %vm214, %v230, 0.0
    %v233 = vadd.f32 %v227, %v231
    %v234 = vadd.f32 %v228, %v232
    %235 = vst [vmem:[#allocation7] sm:$0xff] %v233
    %236 = vst [vmem:[#allocation7 + $0x8] sm:$0xff] %v234
    // Predicated region
    $region18: #{tpu_custom_call.1} parent=1 // pred_check
      _
    $region19: #{tpu_custom_call.1} parent=1 // pred_check_branch
      %238 = sbr.rel (0) target = $region21
    $region20: #{tpu_custom_call.1} parent=1 // pred_region
      %s240 = ssub.s32 256, 256
      %241 = vsyncadd [#allocation4], %s240
      %s242 = sshll.u32 [#allocation7], 4
      %s243 = int_to_ptr.vmem [resolvable:$true] %s242
      %248 = dma.vmem_to_hbm [thread:$0]  %s243, 256, %s2, [#allocation4], 128, 128, 8
    $region21: #{tpu_custom_call.1} parent=1 // pred_fallthru
      _
    // Predicated region
    $region22: #{tpu_custom_call.1} parent=1 // pred_check
      _
    $region23: #{tpu_custom_call.1} parent=1 // pred_check_branch
      %250 = sbr.rel (0) target = $region25
    $region24: #{tpu_custom_call.1} parent=1 // pred_region
      %251 = dma.done [#allocation4], 256
    $region25: #{tpu_custom_call.1} parent=1 // pred_fallthru
      _
    %252 = vsyncpa [#allocation3], 1
    %253 = vsyncpa [#allocation6], 1
    %254 = vsyncpa [#allocation4], 1

</llo_original>
